<compile_context>
chip_gen: v6e
topology: v6e:2x2x1
jax: 0.10.0
libtpu: 0.0.40
codegen_flags: <defaults>
</compile_context>

<pallas_src>
import jax
import jax.numpy as jnp
from jax.experimental import pallas as pl
from jax.experimental.pallas import tpu as pltpu


def _round_up(a, b):
    return ((a + b - 1) // b) * b


# ---------------------------------------------------------------------------
# Generation-aware VMEM budgets
# ---------------------------------------------------------------------------
def _budgets():
    """Returns (live_vmem_budget_bytes, vmem_limit_bytes, min_grid_steps)."""
    try:
        cap = int(pltpu.get_tpu_info().vmem_capacity_bytes)
    except Exception:  # pragma: no cover - fallback when query unavailable
        cap = 128 << 20
    if cap <= (64 << 20):
        # v7x-class: 64 MiB VMEM per TensorCore, 2 TCs per chip.  Keep blocks
        # small enough that double-buffered in+out+temps stay well under 64 MiB
        # and make sure each core still gets >= 2 blocks to pipeline.
        return 28 << 20, 44 << 20, 4
    # v5e / v6e: 128 MiB physical VMEM, 1 TC.  Big blocks = long streamed DMAs.
    return 64 << 20, 96 << 20, 2


# ---------------------------------------------------------------------------
# VMEM-resident kernel: whole (TB, C, HW) block in VMEM
# ---------------------------------------------------------------------------
def _make_ca_kernel(hw_true, hw_pad):
    def ca_kernel(x_ref, w1_ref, w2_ref, b12_ref, w3_ref, b3_ref, o_ref):
        x = x_ref[...]                               # (TB, C, HW_pad), native
        xf = x.astype(jnp.float32)                   # identity for f32 input
        inv_hw = 1.0 / hw_true

        # Two-pass (centered) variance: robust vs E[x^2]-E[x]^2 cancellation.
        mean = jnp.sum(xf, axis=-1) * inv_hw                     # (TB, C)
        centered = xf - mean[:, :, None]
        if hw_pad != hw_true:  # mask zero-padded lanes out of the variance
            lane = jax.lax.broadcasted_iota(jnp.int32, centered.shape, 2)
            centered = jnp.where(lane < hw_true, centered, 0.0)
        var = jnp.sum(centered * centered, axis=-1) * inv_hw
        std = jnp.sqrt(var)                                      # contrast

        # 1x1 convs on (B, C, 1, 1) tensors are plain matmuls over channels;
        # the two squeeze biases are pre-folded into b12.
        y = (jnp.dot(mean, w1_ref[...], preferred_element_type=jnp.float32)
             + jnp.dot(std, w2_ref[...], preferred_element_type=jnp.float32)
             + b12_ref[...])                                     # (TB, Cr)
        y = jnp.maximum(y, 0.0)                                  # ReLU
        y = jnp.dot(y, w3_ref[...], preferred_element_type=jnp.float32) + b3_ref[...]
        y = jax.nn.sigmoid(y)                                    # (TB, C)

        # Scale in the native dtype (cast only y) -> no extra full f32 block.
        o_ref[...] = (x * y[:, :, None].astype(x.dtype)).astype(o_ref.dtype)

    return ca_kernel


# ---------------------------------------------------------------------------
# Streaming fallback kernels (one batch slice does not fit VMEM)
# ---------------------------------------------------------------------------
def _make_stats_kernel(hw_true, num_hw):
    def stats_kernel(x_ref, w1_ref, w2_ref, b12_ref, w3_ref, b3_ref,
                     y_ref, s_acc, sq_acc):
        h = pl.program_id(1)

        @pl.when(h == 0)
        def _():
            s_acc[...] = jnp.zeros_like(s_acc)
            sq_acc[...] = jnp.zeros_like(sq_acc)

        x = x_ref[...].astype(jnp.float32)           # (1, C, THW)
        s_acc[...] += jnp.sum(x, axis=-1)            # (1, C)
        sq_acc[...] += jnp.sum(x * x, axis=-1)

        @pl.when(h == num_hw - 1)
        def _():
            inv_hw = 1.0 / hw_true
            mean = s_acc[...] * inv_hw
            # Single-pass variance (streaming); clamp guards cancellation.
            var = jnp.maximum(sq_acc[...] * inv_hw - mean * mean, 0.0)
            std = jnp.sqrt(var)
            y = (jnp.dot(mean, w1_ref[...], preferred_element_type=jnp.float32)
                 + jnp.dot(std, w2_ref[...], preferred_element_type=jnp.float32)
                 + b12_ref[...])
            y = jnp.maximum(y, 0.0)
            y = jnp.dot(y, w3_ref[...], preferred_element_type=jnp.float32) + b3_ref[...]
            y_ref[...] = jax.nn.sigmoid(y)[:, :, None]           # (1, C, 1)

    return stats_kernel


def _scale_kernel(x_ref, y_ref, o_ref):
    x = x_ref[...]                                   # (1, C, THW), native
    y = y_ref[...]                                   # (1, C, 1), f32
    o_ref[...] = (x * y.astype(x.dtype)).astype(o_ref.dtype)


def _ca_layer_streaming(x_flat, hw_true, w1_t, w2_t, b12, w3_t, b3_2d,
                        *, live_budget, vmem_limit, max_spatial_tile=None):
    B, C, HW = x_flat.shape
    Cr = w1_t.shape[1]
    itemsize = x_flat.dtype.itemsize
    bytes_per_elem = 2 * itemsize + 2 * itemsize + 8   # dbl-buf in/out + f32 temps

    thw_cap = max(128, (live_budget // max(1, C * bytes_per_elem)) // 128 * 128)
    thw = min(thw_cap, _round_up(HW, 128))
    if max_spatial_tile is not None:
        thw = min(thw, max(128, (max_spatial_tile // 128) * 128))
    hw_pad = _round_up(HW, thw)
    num_hw = hw_pad // thw

    if hw_pad != HW:
        x_flat = jnp.pad(x_flat, ((0, 0), (0, 0), (0, hw_pad - HW)))

    full = lambda shape: pl.BlockSpec(shape, lambda b, h: tuple(0 for _ in shape))

    # Pass 1: per-(b, c) sum / sum-of-squares over HW tiles, then the tiny FC.
    y = pl.pallas_call(
        _make_stats_kernel(hw_true, num_hw),
        out_shape=jax.ShapeDtypeStruct((B, C, 1), jnp.float32),
        grid_spec=pltpu.PrefetchScalarGridSpec(
            num_scalar_prefetch=0,
            grid=(B, num_hw),
            in_specs=[
                pl.BlockSpec((1, C, thw), lambda b, h: (b, 0, h)),
                full((C, Cr)), full((C, Cr)), full((1, Cr)),
                full((Cr, C)), full((1, C)),
            ],
            out_specs=pl.BlockSpec((1, C, 1), lambda b, h: (b, 0, 0)),
            scratch_shapes=[pltpu.VMEM((1, C), jnp.float32),
                            pltpu.VMEM((1, C), jnp.float32)],
        ),
        compiler_params=pltpu.CompilerParams(
            dimension_semantics=("parallel", "arbitrary"),
            vmem_limit_bytes=vmem_limit),
    )(x_flat, w1_t, w2_t, b12, w3_t, b3_2d)

    # Pass 2: re-read x per HW tile and scale by the channel attention.
    out = pl.pallas_call(
        _scale_kernel,
        out_shape=jax.ShapeDtypeStruct((B, C, hw_pad), x_flat.dtype),
        grid_spec=pltpu.PrefetchScalarGridSpec(
            num_scalar_prefetch=0,
            grid=(B, num_hw),
            in_specs=[
                pl.BlockSpec((1, C, thw), lambda b, h: (b, 0, h)),
                pl.BlockSpec((1, C, 1), lambda b, h: (b, 0, 0)),
            ],
            out_specs=pl.BlockSpec((1, C, thw), lambda b, h: (b, 0, h)),
        ),
        compiler_params=pltpu.CompilerParams(
            dimension_semantics=("parallel", "parallel"),
            vmem_limit_bytes=vmem_limit),
    )(x_flat, y)

    return out[:, :, :HW]


# ---------------------------------------------------------------------------
# Public wrapper
# ---------------------------------------------------------------------------
def ca_layer(x, w1, b1, w2, b2, w3, b3, *, force_streaming=False,
             max_spatial_tile=None, alias_input=False):
    """x: (B, C, H, W) NCHW.  Conv weights in PyTorch 1x1 shape (out, in, 1, 1)."""
    B, C, H, W = x.shape
    Cr = w1.shape[0]
    HW = H * W

    # Pre-transpose 1x1-conv weights to (in, out); fold the two squeeze biases.
    w1_t = w1.reshape(Cr, C).T            # (C, Cr)
    w2_t = w2.reshape(Cr, C).T            # (C, Cr)
    w3_t = w3.reshape(C, Cr).T            # (Cr, C)
    b12 = (b1 + b2).reshape(1, Cr)
    b3_2d = b3.reshape(1, C)

    live_budget, vmem_limit, min_steps = _budgets()

    itemsize = x.dtype.itemsize
    # Live VMEM bytes per element of one batch slice: double-buffered input +
    # output blocks plus ~2 f32-block-sized temporaries (f32 copy / centered).
    bytes_per_elem = 2 * itemsize + 2 * itemsize + 8

    hw_pad = _round_up(HW, 128)           # lane-dense loads/stores
    per_b_bytes = C * hw_pad * bytes_per_elem

    x_flat = x.reshape(B, C, HW)

    if force_streaming or per_b_bytes > live_budget:
        out = _ca_layer_streaming(
            x_flat, HW, w1_t, w2_t, b12, w3_t, b3_2d,
            live_budget=live_budget, vmem_limit=vmem_limit,
            max_spatial_tile=max_spatial_tile)
        return out.reshape(B, C, H, W)

    # --- VMEM-resident path -------------------------------------------------
    tb_cap = max(1, live_budget // per_b_bytes)
    target_tb = max(1, B // min_steps) if B >= min_steps else 1
    tb = max(1, min(tb_cap, target_tb, B))
    b_pad = _round_up(B, tb)              # no divisor search; pad ragged batch

    if hw_pad != HW or b_pad != B:
        x_flat = jnp.pad(x_flat, ((0, b_pad - B), (0, 0), (0, hw_pad - HW)))

    grid = (b_pad // tb,)
    full = lambda shape: pl.BlockSpec(shape, lambda b: tuple(0 for _ in shape))

    cost = pl.CostEstimate(
        flops=int(b_pad * (6 * C * hw_pad + 8 * C * Cr)),
        transcendentals=int(b_pad * 2 * C),                 # sqrt + sigmoid
        bytes_accessed=int(2 * b_pad * C * hw_pad * itemsize),
    )

    out = pl.pallas_call(
        _make_ca_kernel(HW, hw_pad),
        out_shape=jax.ShapeDtypeStruct((b_pad, C, hw_pad), x.dtype),
        grid_spec=pltpu.PrefetchScalarGridSpec(
            num_scalar_prefetch=0,
            grid=grid,
            in_specs=[
                pl.BlockSpec((tb, C, hw_pad), lambda b: (b, 0, 0)),  # x tile
                full((C, Cr)),                                        # w1^T
                full((C, Cr)),                                        # w2^T
                full((1, Cr)),                                        # b1 + b2
                full((Cr, C)),                                        # w3^T
                full((1, C)),                                         # b3
            ],
            out_specs=pl.BlockSpec((tb, C, hw_pad), lambda b: (b, 0, 0)),
        ),
        compiler_params=pltpu.CompilerParams(
            dimension_semantics=("parallel",),
            vmem_limit_bytes=vmem_limit),
        cost_estimate=cost,
        # Optional: alias x into the output to save an HBM allocation when the
        # caller no longer needs x.
        input_output_aliases=({0: 0} if alias_input else {}),
    )(x_flat, w1_t, w2_t, b12, w3_t, b3_2d)

    return out[:B, :, :HW].reshape(B, C, H, W)


# ---------------------------------------------------------------------------
# Pure-JAX reference
# ---------------------------------------------------------------------------
def reference(x, w1, b1, w2, b2, w3, b3):
    B, C, H, W = x.shape
    Cr = w1.shape[0]
    mean = jnp.mean(x, axis=(2, 3))                              # (B, C)
    std = jnp.sqrt(jnp.mean((x - mean[:, :, None, None]) ** 2, axis=(2, 3)))
    y1 = mean @ w1.reshape(Cr, C).T + b1
    y2 = std @ w2.reshape(Cr, C).T + b2
    y = jnp.maximum(y1 + y2, 0.0) @ w3.reshape(C, Cr).T + b3
    y = jax.nn.sigmoid(y)
    return x * y[:, :, None, None]


if __name__ == "__main__":
    B, C, H, W = 2, 32, 16, 16
    reduction = 16
    Cr = C // reduction

    key = jax.random.PRNGKey(0)
    kx, k1, k2, k3, k4, k5, k6 = jax.random.split(key, 7)

    x = jax.random.normal(kx, (B, C, H, W), dtype=jnp.float32)
    # PyTorch Conv2d 1x1 shapes: (out, in, 1, 1).
    w1 = 0.1 * jax.random.normal(k1, (Cr, C, 1, 1), dtype=jnp.float32)
    b1 = 0.01 * jax.random.normal(k2, (Cr,), dtype=jnp.float32)
    w2 = 0.1 * jax.random.normal(k3, (Cr, C, 1, 1), dtype=jnp.float32)
    b2 = 0.01 * jax.random.normal(k4, (Cr,), dtype=jnp.float32)
    w3 = 0.1 * jax.random.normal(k5, (C, Cr, 1, 1), dtype=jnp.float32)
    b3 = 0.01 * jax.random.normal(k6, (C,), dtype=jnp.float32)

    ref = reference(x, w1, b1, w2, b2, w3, b3)

    # VMEM-resident path.
    out = ca_layer(x, w1, b1, w2, b2, w3, b3)
    out = jax.block_until_ready(out)
    assert out.shape == (B, C, H, W)
    assert jnp.allclose(out, ref, atol=1e-5, rtol=1e-5), "resident path mismatch"

    # Exercise the HBM-streaming fallback path as well (forced, 128-wide tiles).
    out_s = ca_layer(x, w1, b1, w2, b2, w3, b3,
                     force_streaming=True, max_spatial_tile=128)
    out_s = jax.block_until_ready(out_s)
    assert jnp.allclose(out_s, ref, atol=1e-5, rtol=1e-5), "streaming path mismatch"

    print("KERNEL_OK")
</pallas_src>

<mosaic_0001>
module attributes {stable_mosaic.version = 11 : i64} {
  func.func @ca_kernel(%arg0: i32, %arg1: memref<1x32x256xf32, #tpu.memory_space<vmem>>, %arg2: memref<32x2xf32, #tpu.memory_space<vmem>>, %arg3: memref<32x2xf32, #tpu.memory_space<vmem>>, %arg4: memref<1x2xf32, #tpu.memory_space<vmem>>, %arg5: memref<2x32xf32, #tpu.memory_space<vmem>>, %arg6: memref<1x32xf32, #tpu.memory_space<vmem>>, %arg7: memref<1x32x256xf32, #tpu.memory_space<vmem>>) attributes {dimension_semantics = [#tpu.dimension_semantics<parallel>], iteration_bounds = array<i64: 2>, scalar_prefetch = 0 : i64, scratch_operands = 0 : i64, tpu.core_type = #tpu.core_type<tc>, window_params = [{transform_indices = @transform_0, window_bounds = array<i64: 1, 32, 256>}, {pipeline_mode = #tpu.pipeline_mode<synchronous>, transform_indices = @transform_1, window_bounds = array<i64: 32, 2>}, {pipeline_mode = #tpu.pipeline_mode<synchronous>, transform_indices = @transform_2, window_bounds = array<i64: 32, 2>}, {pipeline_mode = #tpu.pipeline_mode<synchronous>, transform_indices = @transform_3, window_bounds = array<i64: 1, 2>}, {pipeline_mode = #tpu.pipeline_mode<synchronous>, transform_indices = @transform_4, window_bounds = array<i64: 2, 32>}, {pipeline_mode = #tpu.pipeline_mode<synchronous>, transform_indices = @transform_5, window_bounds = array<i64: 1, 32>}, {transform_indices = @transform_6, window_bounds = array<i64: 1, 32, 256>}]} {
    %c0 = arith.constant 0 : index
    %c0_0 = arith.constant 0 : index
    %c0_1 = arith.constant 0 : index
    %0 = vector.load %arg1[%c0, %c0_0, %c0_1] : memref<1x32x256xf32, #tpu.memory_space<vmem>>, vector<1x32x256xf32>
    %cst = arith.constant dense<0.000000e+00> : vector<1x32xf32>
    %1 = vector.multi_reduction <add>, %0, %cst [2] : vector<1x32x256xf32> to vector<1x32xf32>
    %cst_2 = arith.constant 3.906250e-03 : f32
    %2 = vector.broadcast %cst_2 : f32 to vector<1x32xf32>
    %3 = arith.mulf %1, %2 : vector<1x32xf32>
    %4 = vector.shape_cast %3 : vector<1x32xf32> to vector<1x32x1xf32>
    %5 = vector.broadcast %4 : vector<1x32x1xf32> to vector<1x32x256xf32>
    %6 = arith.subf %0, %5 : vector<1x32x256xf32>
    %7 = arith.mulf %6, %6 : vector<1x32x256xf32>
    %cst_3 = arith.constant dense<0.000000e+00> : vector<1x32xf32>
    %8 = vector.multi_reduction <add>, %7, %cst_3 [2] : vector<1x32x256xf32> to vector<1x32xf32>
    %cst_4 = arith.constant 3.906250e-03 : f32
    %9 = vector.broadcast %cst_4 : f32 to vector<1x32xf32>
    %10 = arith.mulf %8, %9 : vector<1x32xf32>
    %11 = math.sqrt %10 : vector<1x32xf32>
    %c0_5 = arith.constant 0 : index
    %c0_6 = arith.constant 0 : index
    %12 = vector.load %arg2[%c0_5, %c0_6] : memref<32x2xf32, #tpu.memory_space<vmem>>, vector<32x2xf32>
    %cst_7 = arith.constant dense<0.000000e+00> : vector<1x2xf32>
    %13 = tpu.matmul %3, %12, %cst_7 {dimension_numbers = #tpu.dot_dimension_numbers<[1], [0], [0], [1], [0, 0, 1, 1], [], []>} : vector<1x32xf32>, vector<32x2xf32>, vector<1x2xf32> -> vector<1x2xf32>
    %c0_8 = arith.constant 0 : index
    %c0_9 = arith.constant 0 : index
    %14 = vector.load %arg3[%c0_8, %c0_9] : memref<32x2xf32, #tpu.memory_space<vmem>>, vector<32x2xf32>
    %cst_10 = arith.constant dense<0.000000e+00> : vector<1x2xf32>
    %15 = tpu.matmul %11, %14, %cst_10 {dimension_numbers = #tpu.dot_dimension_numbers<[1], [0], [0], [1], [0, 0, 1, 1], [], []>} : vector<1x32xf32>, vector<32x2xf32>, vector<1x2xf32> -> vector<1x2xf32>
    %16 = arith.addf %13, %15 : vector<1x2xf32>
    %c0_11 = arith.constant 0 : index
    %c0_12 = arith.constant 0 : index
    %17 = vector.load %arg4[%c0_11, %c0_12] : memref<1x2xf32, #tpu.memory_space<vmem>>, vector<1x2xf32>
    %18 = arith.addf %16, %17 : vector<1x2xf32>
    %cst_13 = arith.constant 0.000000e+00 : f32
    %19 = vector.broadcast %cst_13 : f32 to vector<1x2xf32>
    %20 = arith.maximumf %18, %19 : vector<1x2xf32>
    %c0_14 = arith.constant 0 : index
    %c0_15 = arith.constant 0 : index
    %21 = vector.load %arg5[%c0_14, %c0_15] : memref<2x32xf32, #tpu.memory_space<vmem>>, vector<2x32xf32>
    %cst_16 = arith.constant dense<0.000000e+00> : vector<1x32xf32>
    %22 = tpu.matmul %20, %21, %cst_16 {dimension_numbers = #tpu.dot_dimension_numbers<[1], [0], [0], [1], [0, 0, 1, 1], [], []>} : vector<1x2xf32>, vector<2x32xf32>, vector<1x32xf32> -> vector<1x32xf32>
    %c0_17 = arith.constant 0 : index
    %c0_18 = arith.constant 0 : index
    %23 = vector.load %arg6[%c0_17, %c0_18] : memref<1x32xf32, #tpu.memory_space<vmem>>, vector<1x32xf32>
    %24 = arith.addf %22, %23 : vector<1x32xf32>
    %25 = arith.negf %24 : vector<1x32xf32>
    %26 = math.exp %25 : vector<1x32xf32>
    %cst_19 = arith.constant 1.000000e+00 : f32
    %27 = vector.broadcast %cst_19 : f32 to vector<1x32xf32>
    %28 = arith.addf %27, %26 : vector<1x32xf32>
    %29 = arith.divf %27, %28 : vector<1x32xf32>
    %30 = vector.shape_cast %29 : vector<1x32xf32> to vector<1x32x1xf32>
    %31 = vector.broadcast %30 : vector<1x32x1xf32> to vector<1x32x256xf32>
    %32 = arith.mulf %0, %31 : vector<1x32x256xf32>
    %c0_20 = arith.constant 0 : index
    %c0_21 = arith.constant 0 : index
    %c0_22 = arith.constant 0 : index
    %33 = vector.load %arg7[%c0_20, %c0_21, %c0_22] : memref<1x32x256xf32, #tpu.memory_space<vmem>>, vector<1x32x256xf32>
    tpu.vector_store %arg7[%c0_20, %c0_21, %c0_22], %32 {strides = array<i32>} : memref<1x32x256xf32, #tpu.memory_space<vmem>>, vector<1x32x256xf32>,
    return
  }
  func.func @transform_0(%arg0: i32) -> (i32, i32, i32) {
    %c0_i32 = arith.constant 0 : i32
    %c0_i32_0 = arith.constant 0 : i32
    %c0_i32_1 = arith.constant 0 : i32
    return %arg0, %c0_i32, %c0_i32_0 : i32, i32, i32
  }
  func.func @transform_1(%arg0: i32) -> (i32, i32) {
    %c0_i32 = arith.constant 0 : i32
    %c0_i32_0 = arith.constant 0 : i32
    %c0_i32_1 = arith.constant 0 : i32
    return %c0_i32, %c0_i32_0 : i32, i32
  }
  func.func @transform_2(%arg0: i32) -> (i32, i32) {
    %c0_i32 = arith.constant 0 : i32
    %c0_i32_0 = arith.constant 0 : i32
    %c0_i32_1 = arith.constant 0 : i32
    return %c0_i32, %c0_i32_0 : i32, i32
  }
  func.func @transform_3(%arg0: i32) -> (i32, i32) {
    %c0_i32 = arith.constant 0 : i32
    %c0_i32_0 = arith.constant 0 : i32
    %c0_i32_1 = arith.constant 0 : i32
    return %c0_i32, %c0_i32_0 : i32, i32
  }
  func.func @transform_4(%arg0: i32) -> (i32, i32) {
    %c0_i32 = arith.constant 0 : i32
    %c0_i32_0 = arith.constant 0 : i32
    %c0_i32_1 = arith.constant 0 : i32
    return %c0_i32, %c0_i32_0 : i32, i32
  }
  func.func @transform_5(%arg0: i32) -> (i32, i32) {
    %c0_i32 = arith.constant 0 : i32
    %c0_i32_0 = arith.constant 0 : i32
    %c0_i32_1 = arith.constant 0 : i32
    return %c0_i32, %c0_i32_0 : i32, i32
  }
  func.func @transform_6(%arg0: i32) -> (i32, i32, i32) {
    %c0_i32 = arith.constant 0 : i32
    %c0_i32_0 = arith.constant 0 : i32
    %c0_i32_1 = arith.constant 0 : i32
    return %arg0, %c0_i32, %c0_i32_0 : i32, i32, i32
  }
}

</mosaic_0001>

<llo_original>
// kernel: tpu_custom_call.1
$region0: #{tpu_custom_call.1}
  #allocation0 [shape = 'u32[]', space=smem, size = 0x4, offset = 0x4, fixed_abs, tag = 'smem constant byte address 0x4 - core index']
  #allocation1 [shape = 'u32[144,128]{1,0:T(1,128)}', space=vmem, size = 0x12000, scoped, tag = 'internal scratch']
  %s0 = inlined_call_operand.hbm [shape: f32[2,32,256], index: 0, kind: input, shape index: {}]
  %s1 = inlined_call_operand.vmem [shape: f32[32,2], index: 1, kind: input, shape index: {}]
  %s2 = inlined_call_operand.vmem [shape: f32[32,2], index: 2, kind: input, shape index: {}]
  %s3 = inlined_call_operand.vmem [shape: f32[1,2], index: 3, kind: input, shape index: {}]
  %s4 = inlined_call_operand.vmem [shape: f32[2,32], index: 4, kind: input, shape index: {}]
  %s5 = inlined_call_operand.vmem [shape: f32[1,32], index: 5, kind: input, shape index: {}]
  %s6 = inlined_call_operand.hbm [shape: f32[2,32,256], index: 6, kind: output, shape index: {}]
  %s7 = sld [smem:[#allocation0]]
  $region61: #{tpu_custom_call.1} parent=0
    _
  %s9 = ssub.s32 1, %s7
  %s10 = scalar_select 0, %s9, %s7
  $region1: #{tpu_custom_call.1} parent=0
    #allocation2 [shape = 'u8[65536]{0}', space=vmem, size = 0x10000, scoped, tag = 'input window, operand 0']
    #allocation3 [shape = 's32[2]{0}', space=sflag, size = 0x8, scoped, tag = 'scoped memory for tpu_custom_call.1']
    #allocation4 [shape = 's32[2]{0}', space=sflag, size = 0x8, scoped, tag = 'scoped memory for tpu_custom_call.1']
    #allocation5 [shape = 'u8[65536]{0}', space=vmem, size = 0x10000, scoped, tag = 'output window, operand 0']
    %11 = vsyncpa [#allocation3], 0
    %s12 = scalar_lea.sflag [#allocation3], 1
    %13 = vsyncpa %s12, 0
    %14 = vsyncpa [#allocation4], 0
    %s15 = scalar_lea.sflag [#allocation4], 1
    %16 = vsyncpa %s15, 0
    loop: start=0, step=1, limit=4
    $region2: #{tpu_custom_call.1} parent=1 // loop_pre_header
      _
    $region3: #{tpu_custom_call.1} parent=1 // loop_header
      %s18 = sphi 0, %s22
      %p19 = scmp.ge.s32.totalorder %s18, 4
      %s28 = sphi 0, %s30
      %s31 = sphi 0, %s28
      %s32 = sphi 0, %s31
      %s48 = sphi 0, %s32
      %s52 = sphi 0, %s52
      %s54 = sphi 0, %s52
      %s55 = sphi 0, %s54
      %s69 = sphi 0, %s55
      %s73 = sphi 0, %s73
      %s75 = sphi 0, %s73
      %s76 = sphi 0, %s75
      %s90 = sphi 0, %s76
      %s94 = sphi 0, %s94
      %s96 = sphi 0, %s94
      %s97 = sphi 0, %s96
      %s111 = sphi 0, %s97
      %s115 = sphi 0, %s115
      %s117 = sphi 0, %s115
      %s118 = sphi 0, %s117
      %s132 = sphi 0, %s118
      %s136 = sphi 0, %s136
      %s138 = sphi 0, %s136
      %s139 = sphi 0, %s138
      %s153 = sphi 0, %s139
      %s159 = sphi 0, %s161
      %s162 = sphi 0, %s159
      %s163 = sphi 0, %s162
      %s179 = sphi 0, %s163
    $region4: #{tpu_custom_call.1} parent=1 // loop_header_branch
      %21 = sbr.rel (%p19) target = $region8
    $region5: #{tpu_custom_call.1} parent=1 // loop_body
      %s23 = ssub.s32 %s18, 1
      %s24 = ssub.s32 %s18, 2
      %s25 = sadd.s32 %s18, 1
      %s26 = ssub.s32 %s18, %s25
      %p27 = scmp.eq.s32.totalorder %s26, 0
      %s29 = sadd.s32 %s28, 1
      %s30 = scalar_select %p27, %s28, %s29
      %p33 = pneg %p27
      %p34 = scmp.eq.s32.totalorder %s18, 1
      %p35 = por %p33, %p34
      %p36 = scmp.ne.s32.totalorder %s28, %s31
      %p37 = scmp.eq.s32.totalorder %s18, 0
      %p38 = por %p36, %p37
      %p39 = scmp.ne.s32.totalorder %s28, %s31
      %p40 = scmp.eq.s32.totalorder %s23, 1
      %p41 = por %p39, %p40
      %p42 = scmp.ne.s32.totalorder %s31, %s32
      %p43 = scmp.eq.s32.totalorder %s23, 0
      %p44 = por %p42, %p43
      %p45 = scmp.ne.s32.totalorder %s31, %s32
      %p46 = scmp.eq.s32.totalorder %s24, 1
      %p47 = por %p45, %p46
      %p49 = scmp.ne.s32.totalorder %s32, %s48
      %p50 = scmp.eq.s32.totalorder %s24, 0
      %p51 = por %p49, %p50
      %s53 = sadd.s32 %s52, 1
      %p56 = scmp.eq.s32.totalorder %s18, 1
      %p57 = scmp.ne.s32.totalorder %s52, %s54
      %p58 = scmp.eq.s32.totalorder %s18, 0
      %p59 = por %p57, %p58
      %p60 = scmp.ne.s32.totalorder %s52, %s54
      %p61 = scmp.eq.s32.totalorder %s23, 1
      %p62 = por %p60, %p61
      %p63 = scmp.ne.s32.totalorder %s54, %s55
      %p64 = scmp.eq.s32.totalorder %s23, 0
      %p65 = por %p63, %p64
      %p66 = scmp.ne.s32.totalorder %s54, %s55
      %p67 = scmp.eq.s32.totalorder %s24, 1
      %p68 = por %p66, %p67
      %p70 = scmp.ne.s32.totalorder %s55, %s69
      %p71 = scmp.eq.s32.totalorder %s24, 0
      %p72 = por %p70, %p71
      %s74 = sadd.s32 %s73, 1
      %p77 = scmp.eq.s32.totalorder %s18, 1
      %p78 = scmp.ne.s32.totalorder %s73, %s75
      %p79 = scmp.eq.s32.totalorder %s18, 0
      %p80 = por %p78, %p79
      %p81 = scmp.ne.s32.totalorder %s73, %s75
      %p82 = scmp.eq.s32.totalorder %s23, 1
      %p83 = por %p81, %p82
      %p84 = scmp.ne.s32.totalorder %s75, %s76
      %p85 = scmp.eq.s32.totalorder %s23, 0
      %p86 = por %p84, %p85
      %p87 = scmp.ne.s32.totalorder %s75, %s76
      %p88 = scmp.eq.s32.totalorder %s24, 1
      %p89 = por %p87, %p88
      %p91 = scmp.ne.s32.totalorder %s76, %s90
      %p92 = scmp.eq.s32.totalorder %s24, 0
      %p93 = por %p91, %p92
      %s95 = sadd.s32 %s94, 1
      %p98 = scmp.eq.s32.totalorder %s18, 1
      %p99 = scmp.ne.s32.totalorder %s94, %s96
      %p100 = scmp.eq.s32.totalorder %s18, 0
      %p101 = por %p99, %p100
      %p102 = scmp.ne.s32.totalorder %s94, %s96
      %p103 = scmp.eq.s32.totalorder %s23, 1
      %p104 = por %p102, %p103
      %p105 = scmp.ne.s32.totalorder %s96, %s97
      %p106 = scmp.eq.s32.totalorder %s23, 0
      %p107 = por %p105, %p106
      %p108 = scmp.ne.s32.totalorder %s96, %s97
      %p109 = scmp.eq.s32.totalorder %s24, 1
      %p110 = por %p108, %p109
      %p112 = scmp.ne.s32.totalorder %s97, %s111
      %p113 = scmp.eq.s32.totalorder %s24, 0
      %p114 = por %p112, %p113
      %s116 = sadd.s32 %s115, 1
      %p119 = scmp.eq.s32.totalorder %s18, 1
      %p120 = scmp.ne.s32.totalorder %s115, %s117
      %p121 = scmp.eq.s32.totalorder %s18, 0
      %p122 = por %p120, %p121
      %p123 = scmp.ne.s32.totalorder %s115, %s117
      %p124 = scmp.eq.s32.totalorder %s23, 1
      %p125 = por %p123, %p124
      %p126 = scmp.ne.s32.totalorder %s117, %s118
      %p127 = scmp.eq.s32.totalorder %s23, 0
      %p128 = por %p126, %p127
      %p129 = scmp.ne.s32.totalorder %s117, %s118
      %p130 = scmp.eq.s32.totalorder %s24, 1
      %p131 = por %p129, %p130
      %p133 = scmp.ne.s32.totalorder %s118, %s132
      %p134 = scmp.eq.s32.totalorder %s24, 0
      %p135 = por %p133, %p134
      %s137 = sadd.s32 %s136, 1
      %p140 = scmp.eq.s32.totalorder %s18, 1
      %p141 = scmp.ne.s32.totalorder %s136, %s138
      %p142 = scmp.eq.s32.totalorder %s18, 0
      %p143 = por %p141, %p142
      %p144 = scmp.ne.s32.totalorder %s136, %s138
      %p145 = scmp.eq.s32.totalorder %s23, 1
      %p146 = por %p144, %p145
      %p147 = scmp.ne.s32.totalorder %s138, %s139
      %p148 = scmp.eq.s32.totalorder %s23, 0
      %p149 = por %p147, %p148
      %p150 = scmp.ne.s32.totalorder %s138, %s139
      %p151 = scmp.eq.s32.totalorder %s24, 1
      %p152 = por %p150, %p151
      %p154 = scmp.ne.s32.totalorder %s139, %s153
      %p155 = scmp.eq.s32.totalorder %s24, 0
      %p156 = por %p154, %p155
      %s157 = ssub.s32 %s18, %s25
      %p158 = scmp.eq.s32.totalorder %s157, 0
      %s160 = sadd.s32 %s159, 1
      %s161 = scalar_select %p158, %s159, %s160
      %p164 = pneg %p158
      %p165 = scmp.eq.s32.totalorder %s18, 1
      %p166 = por %p164, %p165
      %p167 = scmp.ne.s32.totalorder %s159, %s162
      %p168 = scmp.eq.s32.totalorder %s18, 0
      %p169 = por %p167, %p168
      %p170 = scmp.ne.s32.totalorder %s159, %s162
      %p171 = scmp.eq.s32.totalorder %s23, 1
      %p172 = por %p170, %p171
      %p173 = scmp.ne.s32.totalorder %s162, %s163
      %p174 = scmp.eq.s32.totalorder %s23, 0
      %p175 = por %p173, %p174
      %p176 = scmp.ne.s32.totalorder %s162, %s163
      %p177 = scmp.eq.s32.totalorder %s24, 1
      %p178 = por %p176, %p177
      %p180 = scmp.ne.s32.totalorder %s163, %s179
      %p181 = scmp.eq.s32.totalorder %s24, 0
      %p182 = por %p180, %p181
      %p183 = scmp.le.s32.totalorder 1, %s18
      %p184 = scmp.lt.s32.totalorder %s18, 3
      %p185 = pnand %p183, %p184
      %p186 = pneg %p185
      // Predicated region
      $region9: #{tpu_custom_call.1} parent=5 // pred_check
        _
      $region10: #{tpu_custom_call.1} parent=5 // pred_check_branch
        %188 = sbr.rel (%p185) target = $region12
      $region11: #{tpu_custom_call.1} parent=5 // pred_region
        %s189 = ssub.s32 %s18, 1
        // Predicated region
        $region13: #{tpu_custom_call.1} parent=11 // pred_check
          %p190 = pneg %p65
        $region14: #{tpu_custom_call.1} parent=11 // pred_check_branch
          %192 = sbr.rel (%p190) target = $region16
        $region15: #{tpu_custom_call.1} parent=11 // pred_region
          _
        $region16: #{tpu_custom_call.1} parent=11 // pred_fallthru
          _
        // Predicated region
        $region17: #{tpu_custom_call.1} parent=11 // pred_check
          %p193 = pneg %p86
        $region18: #{tpu_custom_call.1} parent=11 // pred_check_branch
          %195 = sbr.rel (%p193) target = $region20
        $region19: #{tpu_custom_call.1} parent=11 // pred_region
          _
        $region20: #{tpu_custom_call.1} parent=11 // pred_fallthru
          _
        // Predicated region
        $region21: #{tpu_custom_call.1} parent=11 // pred_check
          %p196 = pneg %p107
        $region22: #{tpu_custom_call.1} parent=11 // pred_check_branch
          %198 = sbr.rel (%p196) target = $region24
        $region23: #{tpu_custom_call.1} parent=11 // pred_region
          _
        $region24: #{tpu_custom_call.1} parent=11 // pred_fallthru
          _
        // Predicated region
        $region25: #{tpu_custom_call.1} parent=11 // pred_check
          %p199 = pneg %p128
        $region26: #{tpu_custom_call.1} parent=11 // pred_check_branch
          %201 = sbr.rel (%p199) target = $region28
        $region27: #{tpu_custom_call.1} parent=11 // pred_region
          _
        $region28: #{tpu_custom_call.1} parent=11 // pred_fallthru
          _
        // Predicated region
        $region29: #{tpu_custom_call.1} parent=11 // pred_check
          %p202 = pneg %p149
        $region30: #{tpu_custom_call.1} parent=11 // pred_check_branch
          %204 = sbr.rel (%p202) target = $region32
        $region31: #{tpu_custom_call.1} parent=11 // pred_region
          _
        $region32: #{tpu_custom_call.1} parent=11 // pred_fallthru
          _
      $region12: #{tpu_custom_call.1} parent=5 // pred_fallthru
        _
      %p205 = scmp.lt.s32.totalorder %s18, 2
      // Predicated region
      $region33: #{tpu_custom_call.1} parent=5 // pred_check
        %p206 = pneg %p205
      $region34: #{tpu_custom_call.1} parent=5 // pred_check_branch
        %208 = sbr.rel (%p206) target = $region36
      $region35: #{tpu_custom_call.1} parent=5 // pred_region
        // Predicated region
        $region37: #{tpu_custom_call.1} parent=35 // pred_check
          %p209 = pneg %p38
        $region38: #{tpu_custom_call.1} parent=35 // pred_check_branch
          %211 = sbr.rel (%p209) target = $region40
        $region39: #{tpu_custom_call.1} parent=35 // pred_region
          %s212 = sand.u32 %s28, 1
          %s213 = scalar_lea.sflag [#allocation3], %s212
          %s214 = sand.u32 %s28, 1
          %s215 = smul.addr %s214, 64
          %s216 = scalar_lea.vmem [#allocation2], %s215
          %s218 = ssub.s32 1024, 1024
          %219 = vsyncadd %s213, %s218
          %s220 = smul.addr %s18, 8
          %s221 = smul.addr %s220, 128
          %s222 = scalar_lea.hbm %s0, %s221
          %s223 = sshll.u32 %s216, 4
          %s224 = int_to_ptr.vmem [resolvable:$true] %s223
          %229 = dma.hbm_to_vmem [thread:$0]  %s222, 1024, %s224, %s213, 256, 256, 16
        $region40: #{tpu_custom_call.1} parent=35 // pred_fallthru
          _
      $region36: #{tpu_custom_call.1} parent=5 // pred_fallthru
        _
      %p230 = scmp.le.s32.totalorder 1, %s18
      %p231 = scmp.lt.s32.totalorder %s18, 3
      %p232 = pnand %p230, %p231
      %p233 = pneg %p232
      // Predicated region
      $region41: #{tpu_custom_call.1} parent=5 // pred_check
        _
      $region42: #{tpu_custom_call.1} parent=5 // pred_check_branch
        %235 = sbr.rel (%p232) target = $region44
      $region43: #{tpu_custom_call.1} parent=5 // pred_region
        %s236 = ssub.s32 %s18, 1
        %s237 = sand.u32 %s31, 1
        %s238 = scalar_lea.sflag [#allocation3], %s237
        %s239 = sand.u32 %s31, 1
        %s240 = smul.addr %s239, 64
        %s241 = scalar_lea.vmem [#allocation2], %s240
        // Predicated region
        $region45: #{tpu_custom_call.1} parent=43 // pred_check
          %p242 = pneg %p44
        $region46: #{tpu_custom_call.1} parent=43 // pred_check_branch
          %244 = sbr.rel (%p242) target = $region48
        $region47: #{tpu_custom_call.1} parent=43 // pred_region
          %245 = dma.done %s238, 1024
        $region48: #{tpu_custom_call.1} parent=43 // pred_fallthru
          _
        %s246 = sand.u32 %s31, 1
        %s247 = scalar_lea.sflag [#allocation3], %s246
        %s248 = sand.u32 %s31, 1
        %s249 = smul.addr %s248, 64
        %s250 = scalar_lea.vmem [#allocation2], %s249
        %p251 = pneg %p44
        %p252 = pneg %p41
        %p253 = pneg %p65
        %p254 = pneg %p62
        %p255 = pneg %p86
        %p256 = pneg %p83
        %p257 = pneg %p107
        %p258 = pneg %p104
        %p259 = pneg %p128
        %p260 = pneg %p125
        %p261 = pneg %p149
        %p262 = pneg %p146
        %p263 = pneg %p175
        %p264 = pneg %p172
        %s265 = sand.u32 %s162, 1
        %s266 = scalar_lea.sflag [#allocation4], %s265
        %s267 = sand.u32 %s162, 1
        %s268 = smul.addr %s267, 64
        %s269 = scalar_lea.vmem [#allocation5], %s268
        %v270 = vld [vmem:[%s241] sm:$0xff]
        %v271 = vld [vmem:[%s241 + $0x8] sm:$0xff]
        %v272 = vld [vmem:[%s241 + $0x10] sm:$0xff]
        %v273 = vld [vmem:[%s241 + $0x18] sm:$0xff]
        %v274 = vld [vmem:[%s241 + $0x20] sm:$0xff]
        %v275 = vld [vmem:[%s241 + $0x28] sm:$0xff]
        %v276 = vld [vmem:[%s241 + $0x30] sm:$0xff]
        %v277 = vld [vmem:[%s241 + $0x38] sm:$0xff]
        %v278 = vadd.f32 %v270, %v271
        %279 = vadd.xlane.f32.xlu0 %v278
        %v280 = vpop.xlane.xlu0 %279
        %v281 = vadd.f32 %v272, %v273
        %282 = vadd.xlane.f32.xlu0 %v281
        %v283 = vpop.xlane.xlu0 %282
        %v284 = vadd.f32 %v274, %v275
        %285 = vadd.xlane.f32.xlu0 %v284
        %v286 = vpop.xlane.xlu0 %285
        %v287 = vadd.f32 %v276, %v277
        %288 = vadd.xlane.f32.xlu0 %v287
        %v289 = vpop.xlane.xlu0 %288
        %v290 = vmul.f32 %v280, 0.00390625
        %v291 = vmul.f32 %v283, 0.00390625
        %v292 = vmul.f32 %v286, 0.00390625
        %v293 = vmul.f32 %v289, 0.00390625
        %v294 = vsub.f32 %v270, %v290
        %v295 = vsub.f32 %v271, %v290
        %v296 = vsub.f32 %v272, %v291
        %v297 = vsub.f32 %v273, %v291
        %v298 = vsub.f32 %v274, %v292
        %v299 = vsub.f32 %v275, %v292
        %v300 = vsub.f32 %v276, %v293
        %v301 = vsub.f32 %v277, %v293
        %v302 = vmul.f32 %v294, %v294
        %v303 = vmul.f32 %v295, %v295
        %v304 = vmul.f32 %v296, %v296
        %v305 = vmul.f32 %v297, %v297
        %v306 = vmul.f32 %v298, %v298
        %v307 = vmul.f32 %v299, %v299
        %v308 = vmul.f32 %v300, %v300
        %v309 = vmul.f32 %v301, %v301
        %v310 = vadd.f32 %v302, %v303
        %311 = vadd.xlane.f32.xlu0 %v310
        %v312 = vpop.xlane.xlu0 %311
        %v313 = vadd.f32 %v304, %v305
        %314 = vadd.xlane.f32.xlu0 %v313
        %v315 = vpop.xlane.xlu0 %314
        %v316 = vadd.f32 %v306, %v307
        %317 = vadd.xlane.f32.xlu0 %v316
        %v318 = vpop.xlane.xlu0 %317
        %v319 = vadd.f32 %v308, %v309
        %320 = vadd.xlane.f32.xlu0 %v319
        %v321 = vpop.xlane.xlu0 %320
        %v322 = vmul.f32 %v312, 0.00390625
        %v323 = vmul.f32 %v315, 0.00390625
        %v324 = vmul.f32 %v318, 0.00390625
        %v325 = vmul.f32 %v321, 0.00390625
        %v326 = vrsqrt.pop %v322
        %v327 = vmul.f32 %v322, %v326
        %vm328 = vcmp.eq.f32.partialorder %v322, inf
        %v329 = vsel %vm328, %v322, %v327
        %vm330 = vcmp.eq.f32.partialorder %v322, 0.0
        %v331 = vand.u32 %v322, 2147483648
        %v332 = vsel %vm330, %v331, %v329
        %v333 = vrsqrt.pop %v323
        %v334 = vmul.f32 %v323, %v333
        %vm335 = vcmp.eq.f32.partialorder %v323, inf
        %v336 = vsel %vm335, %v323, %v334
        %vm337 = vcmp.eq.f32.partialorder %v323, 0.0
        %v338 = vand.u32 %v323, 2147483648
        %v339 = vsel %vm337, %v338, %v336
        %v340 = vrsqrt.pop %v324
        %v341 = vmul.f32 %v324, %v340
        %vm342 = vcmp.eq.f32.partialorder %v324, inf
        %v343 = vsel %vm342, %v324, %v341
        %vm344 = vcmp.eq.f32.partialorder %v324, 0.0
        %v345 = vand.u32 %v324, 2147483648
        %v346 = vsel %vm344, %v345, %v343
        %v347 = vrsqrt.pop %v325
        %v348 = vmul.f32 %v325, %v347
        %vm349 = vcmp.eq.f32.partialorder %v325, inf
        %v350 = vsel %vm349, %v325, %v348
        %vm351 = vcmp.eq.f32.partialorder %v325, 0.0
        %v352 = vand.u32 %v325, 2147483648
        %v353 = vsel %vm351, %v352, %v350
        %v354 = vld [vmem:[%s1] sm:$0xff]
        %v355 = vld [vmem:[%s1 + $0x8] sm:$0xff]
        %v356 = vld [vmem:[%s1 + $0x10] sm:$0xff]
        %v357 = vld [vmem:[%s1 + $0x18] sm:$0xff]
        %v358 = vld [vmem:[%s2] sm:$0xff]
        %v359 = vld [vmem:[%s2 + $0x8] sm:$0xff]
        %v360 = vld [vmem:[%s2 + $0x10] sm:$0xff]
        %v361 = vld [vmem:[%s2 + $0x18] sm:$0xff]
        %v366 = vlaneseq
        %v367 = vand.u32 %v366, 127
        %v368 = vlaneseq
        %v369 = vshrl.u32 %v368, 7
        %v370 = vsub.s32 %v367, %v369
        %v371 = vrot.slane %v332, %v370
        %v372 = vadd.s32 %v367, 4294967288
        %v373 = vlaneseq
        %v374 = vshrl.u32 %v373, 7
        %v375 = vsub.s32 %v372, %v374
        %v376 = vrot.slane %v339, %v375
        %vm377 = vcmask 130112
        %v378 = vsel %vm377, %v376, %v371
        %v379 = vadd.s32 %v367, 4294967280
        %v380 = vlaneseq
        %v381 = vshrl.u32 %v380, 7
        %v382 = vsub.s32 %v379, %v381
        %v383 = vrot.slane %v346, %v382
        %vm384 = vcmask 195712
        %v385 = vsel %vm384, %v383, %v378
        %v386 = vadd.s32 %v367, 4294967272
        %v387 = vlaneseq
        %v388 = vshrl.u32 %v387, 7
        %v389 = vsub.s32 %v386, %v388
        %v390 = vrot.slane %v353, %v389
        %vm391 = vcmask 261312
        %v392 = vsel %vm391, %v390, %v385
        %vm393 = vcmask 261120
        %v394 = vsel %vm393, %v392, 0
        %396 = vmatprep.subr.mxu0 0.0
        %397 = vmatpush1.msra.mxu0 0.0
        %398 = vmatprep.subr.mxu0 0.0
        %399 = vmatpush1.msra.mxu0 0.0
        %400 = vmatprep.subr.mxu0 0.0
        %401 = vmatpush1.msra.mxu0 0.0
        %402 = vmatprep.subr.mxu0 0.0
        %403 = vmatpush1.msra.mxu0 0.0
        %404 = vmatprep.subr.mxu0 0.0
        %405 = vmatpush1.msra.mxu0 0.0
        %406 = vmatprep.subr.mxu0 0.0
        %407 = vmatpush1.msra.mxu0 0.0
        %408 = vmatprep.subr.mxu0 0.0
        %409 = vmatpush1.msra.mxu0 0.0
        %410 = vmatprep.subr.mxu0 0.0
        %411 = vmatpush1.msra.mxu0 0.0
        %412 = vmatprep.subr.mxu0 0.0
        %413 = vmatpush1.msra.mxu0 0.0
        %414 = vmatprep.subr.mxu0 0.0
        %415 = vmatpush1.msra.mxu0 0.0
        %416 = vmatprep.subr.mxu0 0.0
        %417 = vmatpush1.msra.mxu0 0.0
        %418 = vmatprep.subr.mxu0 0.0
        %419 = vmatpush1.msra.mxu0 0.0
        %420 = vmatprep.subr.mxu0 0.0
        %421 = vmatpush1.msra.mxu0 %v361
        %422 = vmatprep.subr.mxu0 0.0
        %423 = vmatpush1.msra.mxu0 %v360
        %424 = vmatprep.subr.mxu0 0.0
        %425 = vmatpush1.msra.mxu0 %v359
        %426 = vmatprep.subr.mxu0 0.0
        %427 = vmatpush1.msra.mxu0 %v358
        %428 = vmatprep.subr.mxu0 0.0
        %429 = vmatpush2.msra.mxu0 0.0
        %430 = vmatprep.subr.mxu0 0.0
        %431 = vmatpush2.msra.mxu0 0.0
        %432 = vmatprep.subr.mxu0 0.0
        %433 = vmatpush2.msra.mxu0 0.0
        %434 = vmatprep.subr.mxu0 0.0
        %435 = vmatpush2.msra.mxu0 0.0
        %436 = vmatprep.subr.mxu0 0.0
        %437 = vmatpush2.msra.mxu0 0.0
        %438 = vmatprep.subr.mxu0 0.0
        %439 = vmatpush2.msra.mxu0 0.0
        %440 = vmatprep.subr.mxu0 0.0
        %441 = vmatpush2.msra.mxu0 0.0
        %442 = vmatprep.subr.mxu0 0.0
        %443 = vmatpush2.msra.mxu0 0.0
        %444 = vmatprep.subr.mxu0 0.0
        %445 = vmatpush2.msra.mxu0 0.0
        %446 = vmatprep.subr.mxu0 0.0
        %447 = vmatpush2.msra.mxu0 0.0
        %448 = vmatprep.subr.mxu0 0.0
        %449 = vmatpush2.msra.mxu0 0.0
        %450 = vmatprep.subr.mxu0 0.0
        %451 = vmatpush2.msra.mxu0 0.0
        %452 = vmatprep.subr.mxu0 0.0
        %453 = vmatpush2.msra.mxu0 0.0
        %454 = vmatprep.subr.mxu0 0.0
        %455 = vmatpush2.msra.mxu0 0.0
        %456 = vmatprep.subr.mxu0 0.0
        %457 = vmatpush2.msra.mxu0 0.0
        %458 = vmatprep.subr.mxu0 0.0
        %459 = vmatpush2.msra.mxu0 0.0
        %460 = vmatprep.mubr.f32.mxu0 0.0
        %461 = vmatmul.mubr.f32.gmra.mxu0 %v394
        %v462 = vpop.f32.mrf.mxu0
        %v463 = vadd.f32 0.0, %v462
        %v464 = vpop.f32.mrf.mxu0
        %465 = vdwg.mxu0
        %v470 = vlaneseq
        %v471 = vshrl.u32 %v470, 7
        %v472 = vsub.s32 %v367, %v471
        %v473 = vrot.slane %v290, %v472
        %v474 = vlaneseq
        %v475 = vshrl.u32 %v474, 7
        %v476 = vsub.s32 %v372, %v475
        %v477 = vrot.slane %v291, %v476
        %v478 = vsel %vm377, %v477, %v473
        %v479 = vlaneseq
        %v480 = vshrl.u32 %v479, 7
        %v481 = vsub.s32 %v379, %v480
        %v482 = vrot.slane %v292, %v481
        %v483 = vsel %vm384, %v482, %v478
        %v484 = vlaneseq
        %v485 = vshrl.u32 %v484, 7
        %v486 = vsub.s32 %v386, %v485
        %v487 = vrot.slane %v293, %v486
        %v488 = vsel %vm391, %v487, %v483
        %v489 = vsel %vm393, %v488, 0
        %491 = vmatprep.subr.mxu0 0.0
        %492 = vmatpush1.msra.mxu0 0.0
        %493 = vmatprep.subr.mxu0 0.0
        %494 = vmatpush1.msra.mxu0 0.0
        %495 = vmatprep.subr.mxu0 0.0
        %496 = vmatpush1.msra.mxu0 0.0
        %497 = vmatprep.subr.mxu0 0.0
        %498 = vmatpush1.msra.mxu0 0.0
        %499 = vmatprep.subr.mxu0 0.0
        %500 = vmatpush1.msra.mxu0 0.0
        %501 = vmatprep.subr.mxu0 0.0
        %502 = vmatpush1.msra.mxu0 0.0
        %503 = vmatprep.subr.mxu0 0.0
        %504 = vmatpush1.msra.mxu0 0.0
        %505 = vmatprep.subr.mxu0 0.0
        %506 = vmatpush1.msra.mxu0 0.0
        %507 = vmatprep.subr.mxu0 0.0
        %508 = vmatpush1.msra.mxu0 0.0
        %509 = vmatprep.subr.mxu0 0.0
        %510 = vmatpush1.msra.mxu0 0.0
        %511 = vmatprep.subr.mxu0 0.0
        %512 = vmatpush1.msra.mxu0 0.0
        %513 = vmatprep.subr.mxu0 0.0
        %514 = vmatpush1.msra.mxu0 0.0
        %515 = vmatprep.subr.mxu0 0.0
        %516 = vmatpush1.msra.mxu0 %v357
        %517 = vmatprep.subr.mxu0 0.0
        %518 = vmatpush1.msra.mxu0 %v356
        %519 = vmatprep.subr.mxu0 0.0
        %520 = vmatpush1.msra.mxu0 %v355
        %521 = vmatprep.subr.mxu0 0.0
        %522 = vmatpush1.msra.mxu0 %v354
        %523 = vmatprep.subr.mxu0 0.0
        %524 = vmatpush2.msra.mxu0 0.0
        %525 = vmatprep.subr.mxu0 0.0
        %526 = vmatpush2.msra.mxu0 0.0
        %527 = vmatprep.subr.mxu0 0.0
        %528 = vmatpush2.msra.mxu0 0.0
        %529 = vmatprep.subr.mxu0 0.0
        %530 = vmatpush2.msra.mxu0 0.0
        %531 = vmatprep.subr.mxu0 0.0
        %532 = vmatpush2.msra.mxu0 0.0
        %533 = vmatprep.subr.mxu0 0.0
        %534 = vmatpush2.msra.mxu0 0.0
        %535 = vmatprep.subr.mxu0 0.0
        %536 = vmatpush2.msra.mxu0 0.0
        %537 = vmatprep.subr.mxu0 0.0
        %538 = vmatpush2.msra.mxu0 0.0
        %539 = vmatprep.subr.mxu0 0.0
        %540 = vmatpush2.msra.mxu0 0.0
        %541 = vmatprep.subr.mxu0 0.0
        %542 = vmatpush2.msra.mxu0 0.0
        %543 = vmatprep.subr.mxu0 0.0
        %544 = vmatpush2.msra.mxu0 0.0
        %545 = vmatprep.subr.mxu0 0.0
        %546 = vmatpush2.msra.mxu0 0.0
        %547 = vmatprep.subr.mxu0 0.0
        %548 = vmatpush2.msra.mxu0 0.0
        %549 = vmatprep.subr.mxu0 0.0
        %550 = vmatpush2.msra.mxu0 0.0
        %551 = vmatprep.subr.mxu0 0.0
        %552 = vmatpush2.msra.mxu0 0.0
        %553 = vmatprep.subr.mxu0 0.0
        %554 = vmatpush2.msra.mxu0 0.0
        %555 = vmatprep.mubr.f32.mxu0 0.0
        %556 = vmatmul.mubr.f32.gmra.mxu0 %v489
        %v557 = vpop.f32.mrf.mxu0
        %v558 = vadd.f32 %v463, %v557
        %v559 = vpop.f32.mrf.mxu0
        %560 = vdwg.mxu0
        %v561 = vld [vmem:[%s3] sm:$0x1]
        %v562 = vadd.f32 %v558, %v561
        %v563 = vmax.f32 %v562, 0.0
        %v564 = vld [vmem:[%s4] sm:$0x3]
        %v565 = vld [vmem:[%s5] sm:$0x1]
        %vm566 = vcmask 15360
        %v568 = vsel %vm566, %v563, 0
        %vm570 = vcmask 1041408
        %v572 = vsel %vm570, %v564, 0
        %574 = vmatprep.subr.mxu0 0.0
        %575 = vmatpush1.msra.mxu0 0.0
        %576 = vmatprep.subr.mxu0 0.0
        %577 = vmatpush1.msra.mxu0 0.0
        %578 = vmatprep.subr.mxu0 0.0
        %579 = vmatpush1.msra.mxu0 0.0
        %580 = vmatprep.subr.mxu0 0.0
        %581 = vmatpush1.msra.mxu0 0.0
        %582 = vmatprep.subr.mxu0 0.0
        %583 = vmatpush1.msra.mxu0 0.0
        %584 = vmatprep.subr.mxu0 0.0
        %585 = vmatpush1.msra.mxu0 0.0
        %586 = vmatprep.subr.mxu0 0.0
        %587 = vmatpush1.msra.mxu0 0.0
        %588 = vmatprep.subr.mxu0 0.0
        %589 = vmatpush1.msra.mxu0 0.0
        %590 = vmatprep.subr.mxu0 0.0
        %591 = vmatpush1.msra.mxu0 0.0
        %592 = vmatprep.subr.mxu0 0.0
        %593 = vmatpush1.msra.mxu0 0.0
        %594 = vmatprep.subr.mxu0 0.0
        %595 = vmatpush1.msra.mxu0 0.0
        %596 = vmatprep.subr.mxu0 0.0
        %597 = vmatpush1.msra.mxu0 0.0
        %598 = vmatprep.subr.mxu0 0.0
        %599 = vmatpush1.msra.mxu0 0.0
        %600 = vmatprep.subr.mxu0 0.0
        %601 = vmatpush1.msra.mxu0 0.0
        %602 = vmatprep.subr.mxu0 0.0
        %603 = vmatpush1.msra.mxu0 0.0
        %604 = vmatprep.subr.mxu0 0.0
        %605 = vmatpush1.msra.mxu0 %v572
        %606 = vmatprep.subr.mxu0 0.0
        %607 = vmatpush2.msra.mxu0 0.0
        %608 = vmatprep.subr.mxu0 0.0
        %609 = vmatpush2.msra.mxu0 0.0
        %610 = vmatprep.subr.mxu0 0.0
        %611 = vmatpush2.msra.mxu0 0.0
        %612 = vmatprep.subr.mxu0 0.0
        %613 = vmatpush2.msra.mxu0 0.0
        %614 = vmatprep.subr.mxu0 0.0
        %615 = vmatpush2.msra.mxu0 0.0
        %616 = vmatprep.subr.mxu0 0.0
        %617 = vmatpush2.msra.mxu0 0.0
        %618 = vmatprep.subr.mxu0 0.0
        %619 = vmatpush2.msra.mxu0 0.0
        %620 = vmatprep.subr.mxu0 0.0
        %621 = vmatpush2.msra.mxu0 0.0
        %622 = vmatprep.subr.mxu0 0.0
        %623 = vmatpush2.msra.mxu0 0.0
        %624 = vmatprep.subr.mxu0 0.0
        %625 = vmatpush2.msra.mxu0 0.0
        %626 = vmatprep.subr.mxu0 0.0
        %627 = vmatpush2.msra.mxu0 0.0
        %628 = vmatprep.subr.mxu0 0.0
        %629 = vmatpush2.msra.mxu0 0.0
        %630 = vmatprep.subr.mxu0 0.0
        %631 = vmatpush2.msra.mxu0 0.0
        %632 = vmatprep.subr.mxu0 0.0
        %633 = vmatpush2.msra.mxu0 0.0
        %634 = vmatprep.subr.mxu0 0.0
        %635 = vmatpush2.msra.mxu0 0.0
        %636 = vmatprep.subr.mxu0 0.0
        %637 = vmatpush2.msra.mxu0 0.0
        %638 = vmatprep.mubr.f32.mxu0 0.0
        %639 = vmatmul.mubr.f32.gmra.mxu0 %v568
        %v640 = vpop.f32.mrf.mxu0
        %v641 = vadd.f32 %v565, %v640
        %v642 = vpop.f32.mrf.mxu0
        %643 = vdwg.mxu0
        %v644 = vxor.u32 %v641, 2147483648
        %v645 = vmul.f32 %v644, 1.442695
        %v646 = vpow.pop %v645
        %v647 = vadd.f32 %v646, 1.0
        %v648 = vrcp.pop %v647
        %v649 = vmul.f32 1.0, %v648
        %v650 = vlaneseq
        %v651 = vshrl.u32 %v650, 7
        %v652 = vsub.s32 0, %v651
        %v653 = vrot.slane %v649, %v652
        %655 = vbcast.lane.b32.xlu0 %v653, 256
        %v656 = vpop.permute.xlu0 %655
        %s658 = sor.u32 256, 8
        %659 = vbcast.lane.b32.xlu0 %v653, %s658
        %v660 = vpop.permute.xlu0 %659
        %s662 = sor.u32 256, 16
        %663 = vbcast.lane.b32.xlu0 %v653, %s662
        %v664 = vpop.permute.xlu0 %663
        %s666 = sor.u32 256, 24
        %667 = vbcast.lane.b32.xlu0 %v653, %s666
        %v668 = vpop.permute.xlu0 %667
        %v669 = vmul.f32 %v270, %v656
        %v670 = vmul.f32 %v271, %v656
        %v671 = vmul.f32 %v272, %v660
        %v672 = vmul.f32 %v273, %v660
        %v673 = vmul.f32 %v274, %v664
        %v674 = vmul.f32 %v275, %v664
        %v675 = vmul.f32 %v276, %v668
        %v676 = vmul.f32 %v277, %v668
        %677 = vst [vmem:[%s269] sm:$0xff] %v669
        %678 = vst [vmem:[%s269 + $0x8] sm:$0xff] %v670
        %679 = vst [vmem:[%s269 + $0x10] sm:$0xff] %v671
        %680 = vst [vmem:[%s269 + $0x18] sm:$0xff] %v672
        %681 = vst [vmem:[%s269 + $0x20] sm:$0xff] %v673
        %682 = vst [vmem:[%s269 + $0x28] sm:$0xff] %v674
        %683 = vst [vmem:[%s269 + $0x30] sm:$0xff] %v675
        %684 = vst [vmem:[%s269 + $0x38] sm:$0xff] %v676
        %s685 = sand.u32 %s162, 1
        %s686 = scalar_lea.sflag [#allocation4], %s685
        %s687 = sand.u32 %s162, 1
        %s688 = smul.addr %s687, 64
        %s689 = scalar_lea.vmem [#allocation5], %s688
        // Predicated region
        $region49: #{tpu_custom_call.1} parent=43 // pred_check
          %p690 = pneg %p172
        $region50: #{tpu_custom_call.1} parent=43 // pred_check_branch
          %692 = sbr.rel (%p690) target = $region52
        $region51: #{tpu_custom_call.1} parent=43 // pred_region
          %s694 = ssub.s32 1024, 1024
          %695 = vsyncadd %s686, %s694
          %s696 = smul.addr %s23, 8
          %s697 = smul.addr %s696, 128
          %s698 = scalar_lea.hbm %s6, %s697
          %s699 = sshll.u32 %s689, 4
          %s700 = int_to_ptr.vmem [resolvable:$true] %s699
          %705 = dma.vmem_to_hbm [thread:$0]  %s700, 1024, %s698, %s686, 256, 256, 16
        $region52: #{tpu_custom_call.1} parent=43 // pred_fallthru
          _
      $region44: #{tpu_custom_call.1} parent=5 // pred_fallthru
        _
      %p706 = scmp.le.s32.totalorder 2, %s18
      // Predicated region
      $region53: #{tpu_custom_call.1} parent=5 // pred_check
        %p707 = pneg %p706
      $region54: #{tpu_custom_call.1} parent=5 // pred_check_branch
        %709 = sbr.rel (%p707) target = $region56
      $region55: #{tpu_custom_call.1} parent=5 // pred_region
        %s710 = ssub.s32 %s18, 2
        // Predicated region
        $region57: #{tpu_custom_call.1} parent=55 // pred_check
          %p711 = pneg %p178
        $region58: #{tpu_custom_call.1} parent=55 // pred_check_branch
          %713 = sbr.rel (%p711) target = $region60
        $region59: #{tpu_custom_call.1} parent=55 // pred_region
          %s714 = sand.u32 %s163, 1
          %s715 = scalar_lea.sflag [#allocation4], %s714
          %s716 = sand.u32 %s163, 1
          %s717 = smul.addr %s716, 64
          %s718 = scalar_lea.vmem [#allocation5], %s717
          %719 = dma.done %s715, 1024
        $region60: #{tpu_custom_call.1} parent=55 // pred_fallthru
          _
      $region56: #{tpu_custom_call.1} parent=5 // pred_fallthru
        _
    $region6: #{tpu_custom_call.1} parent=1 // loop_footer
      %s22 = sadd.s32 1, %s18
    $region7: #{tpu_custom_call.1} parent=1 // loop_footer_branch
      %17 = sbr.rel target = $region3
    $region8: #{tpu_custom_call.1} parent=1 // loop_exit
      _
    %720 = vsyncpa [#allocation3], 1
    %s721 = scalar_lea.sflag [#allocation3], 1
    %722 = vsyncpa %s721, 1
    %723 = vsyncpa [#allocation4], 1
    %s724 = scalar_lea.sflag [#allocation4], 1
    %725 = vsyncpa %s724, 1

</llo_original>
